<compile_context>
chip_gen: v7x
topology: tpu7x:2x2x1
jax: 0.10.0
libtpu: 0.0.40
codegen_flags: <defaults>
</compile_context>

<pallas_src>
import jax
import jax.numpy as jnp
from jax.experimental import pallas as pl
from jax.experimental.pallas import tpu as pltpu

_MIB = 1024 * 1024


def _round_up(x, m):
    return ((x + m - 1) // m) * m


def _vmem_budget_bytes():
    """Per-chip VMEM scope: ~85% of physical (v5e/v6e ~108 of 128 MiB; v7x 48 of 64)."""
    cap = 64 * _MIB  # conservative fallback, safe on every chip
    try:
        cap = int(getattr(pltpu.get_tpu_info(), "vmem_capacity_bytes", cap))
    except Exception:
        pass
    return max(16 * _MIB, min(int(0.85 * cap), cap - 16 * _MIB))


def _pick_s_chunk(S, Dv, Hp, budget_bytes):
    """Largest TS dividing S whose folded f32 weight chunk (TS*Dv, Hp) fits the
    budget.  TS < S additionally requires TS*Dv % 128 == 0 (lane-dim legality
    of the streamed (TB, TS*Dv) activation block)."""
    if S * Dv * Hp * 4 <= budget_bytes:
        return S
    best = None
    for ts in range(1, S):
        if S % ts == 0 and (ts * Dv) % 128 == 0 and ts * Dv * Hp * 4 <= budget_bytes:
            best = ts
    return best if best is not None else S


def _pick_batch_tile(B, row_bytes, fixed_bytes, vmem_limit):
    """Batch tile sized from the VMEM byte budget (no artificial row cap); kept a
    multiple of 8 and capped so the batch grid axis has >= 2 steps (v7x: 2 TCs)."""
    if B <= 8:
        return B                                   # block == full array dim: always legal
    avail = max(int(0.9 * (vmem_limit - fixed_bytes)), 2 * _MIB)
    tb = max(8, min(avail // max(1, row_bytes), B))
    tb = (tb // 8) * 8
    if B >= 16:
        tb = min(tb, _round_up(pl.cdiv(B, 2), 8))  # >= 2 grid steps on the parallel axis
    return max(8, tb)


def _ee_mlp_kernel(vchunk_ref, sca_ref, wv_ref, ws_ref, bias_ref, w2_ref,
                   out_ref, acc_ref):
    """Normalization + mean-pool are pre-folded into wv/ws/bias; the grid's
    second axis accumulates the S-chunks, so the body is pure MXU work."""
    j = pl.program_id(1)
    Hp = wv_ref.shape[1]
    Op = w2_ref.shape[1]

    @pl.when(j == 0)
    def _():
        # scalar path (normalization folded in) + folded bias seed the accumulator
        acc_ref[...] = (jnp.dot(sca_ref[...], ws_ref[...],
                                preferred_element_type=jnp.float32)
                        + bias_ref[0:1, :Hp])

    # vector path: (TB, TS*Dv) @ (TS*Dv, Hp); normalization + 1/S pooling folded in
    acc_ref[...] += jnp.dot(vchunk_ref[...], wv_ref[...],
                            preferred_element_type=jnp.float32)

    @pl.when(j == pl.num_programs(1) - 1)
    def _():
        h = jnp.maximum(acc_ref[...], 0.0)                       # ReLU in f32
        out = jnp.dot(h, w2_ref[...], preferred_element_type=jnp.float32)
        out_ref[...] = (out + bias_ref[1:2, :Op]).astype(out_ref.dtype)


def prepare_params(params, S, *, s_chunks=None, weight_chunk_budget_bytes=8 * _MIB):
    """One-time fold of the normalization and the (all-False-mask) mean-pool over
    S into the first-layer weights/bias, plus lane-dense zero-padding.  Hoisted
    out of the per-call path so repeated inference reuses the folded weights."""
    Dv, H = params["w1v"].shape
    Ds = params["w1s"].shape[0]
    O = params["w2"].shape[1]
    Hp = _round_up(H, 128)
    Op = _round_up(O, 128)
    P = max(Hp, Op)

    # (v - vmean)/vstd and (s - smean)/sstd are affine; pooling is linear; the
    # whole pre-ReLU path folds exactly into adjusted weights/bias.
    # NOTE: like the PyTorch module, no epsilon guard on std (faithful).
    inv_vstd = 1.0 / params["vstd"].reshape(-1)                   # (Dv,)
    inv_sstd = 1.0 / params["sstd"].reshape(-1)                   # (Ds,)
    w1v_n = params["w1v"] * inv_vstd[:, None]                     # (Dv, H)
    w1s_n = params["w1s"] * inv_sstd[:, None]                     # (Ds, H)
    b1_n = (params["b1"].reshape(-1)
            - (params["vmean"].reshape(-1) * inv_vstd) @ params["w1v"]
            - (params["smean"].reshape(-1) * inv_sstd) @ params["w1s"])   # (H,)

    # Mean over S folded into the weight, replicated only over one S-chunk of
    # size TS (the grid's reduction axis sums the chunks) -> weight VMEM stays
    # <= TS*Dv*Hp*4 instead of S*Dv*Hp*4.
    if s_chunks is None:
        ts = _pick_s_chunk(S, Dv, Hp, weight_chunk_budget_bytes)
    else:
        assert S % s_chunks == 0, "s_chunks must divide S"
        ts = S // s_chunks
        assert ts == S or (ts * Dv) % 128 == 0, "chunk lane dim must be a multiple of 128"
    wv_chunk = jnp.tile(w1v_n / S, (ts, 1))                       # (TS*Dv, H)

    f32 = jnp.float32
    wv_p = jnp.zeros((ts * Dv, Hp), f32).at[:, :H].set(wv_chunk)
    ws_p = jnp.zeros((Ds, Hp), f32).at[:, :H].set(w1s_n)
    w2_p = jnp.zeros((Hp, Op), f32).at[:H, :O].set(params["w2"])
    bias = (jnp.zeros((2, P), f32)
            .at[0, :H].set(b1_n)
            .at[1, :O].set(params["b2"].reshape(-1)))             # biases stay f32

    return {"wv": wv_p, "ws": ws_p, "w2": w2_p, "bias": bias,
            "S": S, "TS": ts, "Dv": Dv, "Ds": Ds,
            "H": H, "O": O, "Hp": Hp, "Op": Op}


def model_with_normalization(vector, scalar, prepared, *, batch_tile=None):
    """Pallas forward.  vector: (B, S, Dv), scalar: (B, Ds) — streamed in their
    native dtype (pass bf16 from the producer to halve HBM bytes; no wrapper
    cast, which would otherwise add a full extra read+write pass)."""
    B, S, Dv = vector.shape
    Ds = scalar.shape[1]
    assert S == prepared["S"] and Dv == prepared["Dv"] and Ds == prepared["Ds"]
    TS, Hp, Op, O = prepared["TS"], prepared["Hp"], prepared["Op"], prepared["O"]
    NS = S // TS
    SDv = S * Dv

    wv_p, ws_p, w2_p, bias = prepared["wv"], prepared["ws"], prepared["w2"], prepared["bias"]
    P = bias.shape[1]

    # Lane-dense activations: (B, S, Dv) -> (B, S*Dv).  Free reshape, NO dtype cast.
    vflat = vector.reshape(B, SDv)

    vmem_limit = _vmem_budget_bytes()
    itemsize_v = jnp.dtype(vector.dtype).itemsize
    itemsize_s = jnp.dtype(scalar.dtype).itemsize
    fixed = 2 * 4 * (wv_p.size + ws_p.size + w2_p.size + bias.size)  # double-buffered weights
    # TODO(synk): pipeline_mode=pl.Buffered(1) on the constant weight specs would
    # halve `fixed`; left off pending wider support in the installed jax version.
    row_bytes = (2 * TS * Dv * itemsize_v    # streamed vector chunk (double buffer)
                 + 2 * Ds * itemsize_s       # streamed scalar tile
                 + 2 * Op * 4                # output tile
                 + Hp * 4)                   # f32 accumulator scratch
    TB = batch_tile if batch_tile is not None else _pick_batch_tile(
        B, row_bytes, fixed, vmem_limit)
    vmem_limit = int(max(vmem_limit, fixed + TB * row_bytes + 2 * _MIB))

    grid = (pl.cdiv(B, TB), NS)

    in_specs = [
        pl.BlockSpec((TB, TS * Dv), lambda i, j: (i, j)),   # streamed per (batch, S-chunk)
        pl.BlockSpec((TB, Ds), lambda i, j: (i, 0)),        # streamed per batch tile
        pl.BlockSpec((TS * Dv, Hp), lambda i, j: (0, 0)),   # VMEM-resident weights
        pl.BlockSpec((Ds, Hp), lambda i, j: (0, 0)),
        pl.BlockSpec((2, P), lambda i, j: (0, 0)),          # packed biases (one DMA)
        pl.BlockSpec((Hp, Op), lambda i, j: (0, 0)),
    ]
    out_spec = pl.BlockSpec((TB, Op), lambda i, j: (i, 0))  # full-lane (unmasked) stores

    flops = 2 * B * (SDv * Hp + Ds * Hp + Hp * Op)
    bytes_accessed = (vflat.size * itemsize_v + scalar.size * itemsize_s
                      + 4 * (wv_p.size + ws_p.size + w2_p.size + bias.size)
                      + B * Op * 4)

    out_padded = pl.pallas_call(
        _ee_mlp_kernel,
        out_shape=jax.ShapeDtypeStruct((B, Op), jnp.float32),
        grid_spec=pltpu.PrefetchScalarGridSpec(
            num_scalar_prefetch=0,
            grid=grid,
            in_specs=in_specs,
            out_specs=out_spec,
            scratch_shapes=[pltpu.VMEM((TB, Hp), jnp.float32)],
        ),
        compiler_params=pltpu.CompilerParams(
            dimension_semantics=("parallel", "arbitrary"),   # batch axis: megacore/2-TC
            vmem_limit_bytes=vmem_limit,
        ),
        cost_estimate=pl.CostEstimate(flops=flops, transcendentals=0,
                                      bytes_accessed=bytes_accessed),
    )(vflat, scalar, wv_p, ws_p, bias, w2_p)

    # TODO(synk): if the consumer can accept the lane-padded (B, Op) slab (or a
    # bf16 slab), drop this slice to avoid an extra HBM pass when O << 128.
    return out_padded[:, :O]


def _reference(vector, scalar, params):
    """Pure-JAX reference matching the PyTorch module (normalize -> ee_model)."""
    vnorm = (vector - params["vmean"]) / params["vstd"]
    snorm = (scalar - params["smean"]) / params["sstd"]
    pooled = jnp.mean(vnorm, axis=1)   # all-False padding mask => plain mean
    h = jnp.maximum(pooled @ params["w1v"] + snorm @ params["w1s"] + params["b1"], 0.0)
    return h @ params["w2"] + params["b2"]


def _init_params(key, Dv, Ds, H, O):
    ks = jax.random.split(key, 8)
    return {
        # normalization stats (train_stat values), shaped like the torch buffers
        "vmean": jax.random.normal(ks[0], (1, 1, Dv), jnp.float32),
        "vstd": jnp.abs(jax.random.normal(ks[1], (1, 1, Dv), jnp.float32)) + 0.5,
        "smean": jax.random.normal(ks[2], (1, Ds), jnp.float32),
        "sstd": jnp.abs(jax.random.normal(ks[3], (1, Ds), jnp.float32)) + 0.5,
        # stand-in ee_model weights
        "w1v": jax.random.normal(ks[4], (Dv, H), jnp.float32) * 0.1,
        "w1s": jax.random.normal(ks[5], (Ds, H), jnp.float32) * 0.1,
        "b1": jnp.zeros((1, H), jnp.float32),
        "w2": jax.random.normal(ks[6], (H, O), jnp.float32) * 0.1,
        "b2": jnp.zeros((1, O), jnp.float32),
    }


if __name__ == "__main__":
    key = jax.random.PRNGKey(0)
    k_v, k_s, k_p, k_v2, k_s2, k_p2 = jax.random.split(key, 6)

    # ---- 1) module-faithful small shapes, f32 (single grid step) ----
    B, S, Dv, Ds, H, O = 2, 8, 4, 3, 32, 2
    vector = jax.random.normal(k_v, (B, S, Dv), jnp.float32)
    scalar = jax.random.normal(k_s, (B, Ds), jnp.float32)
    params = _init_params(k_p, Dv, Ds, H, O)

    prepared = prepare_params(params, S)           # hoisted one-time weight fold
    fwd = jax.jit(lambda v, s: model_with_normalization(v, s, prepared))

    out = jax.block_until_ready(fwd(vector, scalar))
    ref = _reference(vector, scalar, params)
    assert out.shape == (B, O)
    assert jnp.allclose(out, ref, atol=1e-5, rtol=1e-5), (out, ref)

    # ---- 2) batch-tiled + S-chunk-accumulated path (partial trailing batch tile,
    #         2x2 grid: exercises the accumulator and megacore-parallel batch axis) ----
    B2, S2, Dv2, Ds2, H2, O2 = 60, 8, 32, 5, 48, 3
    vector2 = jax.random.normal(k_v2, (B2, S2, Dv2), jnp.float32)
    scalar2 = jax.random.normal(k_s2, (B2, Ds2), jnp.float32)
    params2 = _init_params(k_p2, Dv2, Ds2, H2, O2)
    prepared2 = prepare_params(params2, S2, s_chunks=2)     # TS*Dv2 = 128 per chunk
    out2 = jax.block_until_ready(
        model_with_normalization(vector2, scalar2, prepared2, batch_tile=32))
    ref2 = _reference(vector2, scalar2, params2)
    assert out2.shape == (B2, O2)
    assert jnp.allclose(out2, ref2, atol=1e-3, rtol=1e-3), (out2, ref2)

    # ---- 3) bf16 producer path: inputs already arrive bf16 (no wrapper cast, so
    #         the dominant (B,S,Dv) stream really is half the HBM bytes); weights
    #         and all accumulation stay f32.  Loose tolerance = input quantization. ----
    out3 = jax.block_until_ready(
        fwd(vector.astype(jnp.bfloat16), scalar.astype(jnp.bfloat16)))
    assert out3.shape == (B, O)
    assert jnp.allclose(out3, ref, atol=1e-1, rtol=1e-1), (out3, ref)

    print("KERNEL_OK")
</pallas_src>

<mosaic_0001>
module attributes {stable_mosaic.version = 11 : i64} {
  func.func @_ee_mlp_kernel(%arg0: i32, %arg1: i32, %arg2: memref<2x32xf32, #tpu.memory_space<vmem>>, %arg3: memref<2x3xf32, #tpu.memory_space<vmem>>, %arg4: memref<32x128xf32, #tpu.memory_space<vmem>>, %arg5: memref<3x128xf32, #tpu.memory_space<vmem>>, %arg6: memref<2x128xf32, #tpu.memory_space<vmem>>, %arg7: memref<128x128xf32, #tpu.memory_space<vmem>>, %arg8: memref<2x128xf32, #tpu.memory_space<vmem>>, %arg9: memref<2x128xf32, #tpu.memory_space<vmem>>) attributes {dimension_semantics = [#tpu.dimension_semantics<parallel>, #tpu.dimension_semantics<arbitrary>], iteration_bounds = array<i64: 1, 1>, scalar_prefetch = 0 : i64, scratch_operands = 1 : i64, tpu.core_type = #tpu.core_type<tc>, window_params = [{transform_indices = @transform_0, window_bounds = array<i64: 2, 32>}, {transform_indices = @transform_1, window_bounds = array<i64: 2, 3>}, {pipeline_mode = #tpu.pipeline_mode<synchronous>, transform_indices = @transform_2, window_bounds = array<i64: 32, 128>}, {pipeline_mode = #tpu.pipeline_mode<synchronous>, transform_indices = @transform_3, window_bounds = array<i64: 3, 128>}, {pipeline_mode = #tpu.pipeline_mode<synchronous>, transform_indices = @transform_4, window_bounds = array<i64: 2, 128>}, {pipeline_mode = #tpu.pipeline_mode<synchronous>, transform_indices = @transform_5, window_bounds = array<i64: 128, 128>}, {transform_indices = @transform_6, window_bounds = array<i64: 2, 128>}]} {
    %c0_i32 = arith.constant 0 : i32
    %0 = arith.cmpi eq, %arg1, %c0_i32 : i32
    %1 = arith.extui %0 : i1 to i32
    %c0_i32_0 = arith.constant 0 : i32
    %2 = arith.cmpi ne, %1, %c0_i32_0 : i32
    scf.if %2 {
      %c0_10 = arith.constant 0 : index
      %c0_11 = arith.constant 0 : index
      %12 = vector.load %arg3[%c0_10, %c0_11] : memref<2x3xf32, #tpu.memory_space<vmem>>, vector<2x3xf32>
      %c0_12 = arith.constant 0 : index
      %c0_13 = arith.constant 0 : index
      %13 = vector.load %arg5[%c0_12, %c0_13] : memref<3x128xf32, #tpu.memory_space<vmem>>, vector<3x128xf32>
      %cst_14 = arith.constant dense<0.000000e+00> : vector<2x128xf32>
      %14 = tpu.matmul %12, %13, %cst_14 {dimension_numbers = #tpu.dot_dimension_numbers<[1], [0], [0], [1], [0, 0, 1, 1], [], []>} : vector<2x3xf32>, vector<3x128xf32>, vector<2x128xf32> -> vector<2x128xf32>
      %c0_15 = arith.constant 0 : index
      %c0_16 = arith.constant 0 : index
      %15 = vector.load %arg6[%c0_15, %c0_16] : memref<2x128xf32, #tpu.memory_space<vmem>>, vector<1x128xf32>
      %16 = vector.broadcast %15 : vector<1x128xf32> to vector<2x128xf32>
      %17 = arith.addf %14, %16 : vector<2x128xf32>
      %c0_17 = arith.constant 0 : index
      %c0_18 = arith.constant 0 : index
      %18 = vector.load %arg9[%c0_17, %c0_18] : memref<2x128xf32, #tpu.memory_space<vmem>>, vector<2x128xf32>
      tpu.vector_store %arg9[%c0_17, %c0_18], %17 {strides = array<i32>} : memref<2x128xf32, #tpu.memory_space<vmem>>, vector<2x128xf32>,
    } else {
    }
    %c0 = arith.constant 0 : index
    %c0_1 = arith.constant 0 : index
    %3 = vector.load %arg9[%c0, %c0_1] : memref<2x128xf32, #tpu.memory_space<vmem>>, vector<2x128xf32>
    %c0_2 = arith.constant 0 : index
    %c0_3 = arith.constant 0 : index
    %4 = vector.load %arg2[%c0_2, %c0_3] : memref<2x32xf32, #tpu.memory_space<vmem>>, vector<2x32xf32>
    %c0_4 = arith.constant 0 : index
    %c0_5 = arith.constant 0 : index
    %5 = vector.load %arg4[%c0_4, %c0_5] : memref<32x128xf32, #tpu.memory_space<vmem>>, vector<32x128xf32>
    %cst = arith.constant dense<0.000000e+00> : vector<2x128xf32>
    %6 = tpu.matmul %4, %5, %cst {dimension_numbers = #tpu.dot_dimension_numbers<[1], [0], [0], [1], [0, 0, 1, 1], [], []>} : vector<2x32xf32>, vector<32x128xf32>, vector<2x128xf32> -> vector<2x128xf32>
    %7 = arith.addf %3, %6 : vector<2x128xf32>
    %c0_6 = arith.constant 0 : index
    %c0_7 = arith.constant 0 : index
    %8 = vector.load %arg9[%c0_6, %c0_7] : memref<2x128xf32, #tpu.memory_space<vmem>>, vector<2x128xf32>
    tpu.vector_store %arg9[%c0_6, %c0_7], %7 {strides = array<i32>} : memref<2x128xf32, #tpu.memory_space<vmem>>, vector<2x128xf32>,
    %c0_i32_8 = arith.constant 0 : i32
    %9 = arith.cmpi eq, %arg1, %c0_i32_8 : i32
    %10 = arith.extui %9 : i1 to i32
    %c0_i32_9 = arith.constant 0 : i32
    %11 = arith.cmpi ne, %10, %c0_i32_9 : i32
    scf.if %11 {
      %c0_10 = arith.constant 0 : index
      %c0_11 = arith.constant 0 : index
      %12 = vector.load %arg9[%c0_10, %c0_11] : memref<2x128xf32, #tpu.memory_space<vmem>>, vector<2x128xf32>
      %cst_12 = arith.constant 0.000000e+00 : f32
      %13 = vector.broadcast %cst_12 : f32 to vector<2x128xf32>
      %14 = arith.maximumf %12, %13 : vector<2x128xf32>
      %c0_13 = arith.constant 0 : index
      %c0_14 = arith.constant 0 : index
      %15 = vector.load %arg7[%c0_13, %c0_14] : memref<128x128xf32, #tpu.memory_space<vmem>>, vector<128x128xf32>
      %cst_15 = arith.constant dense<0.000000e+00> : vector<2x128xf32>
      %16 = tpu.matmul %14, %15, %cst_15 {dimension_numbers = #tpu.dot_dimension_numbers<[1], [0], [0], [1], [0, 0, 1, 1], [], []>} : vector<2x128xf32>, vector<128x128xf32>, vector<2x128xf32> -> vector<2x128xf32>
      %c1 = arith.constant 1 : index
      %c0_16 = arith.constant 0 : index
      %17 = vector.load %arg6[%c1, %c0_16] : memref<2x128xf32, #tpu.memory_space<vmem>>, vector<1x128xf32>
      %18 = vector.broadcast %17 : vector<1x128xf32> to vector<2x128xf32>
      %19 = arith.addf %16, %18 : vector<2x128xf32>
      %c0_17 = arith.constant 0 : index
      %c0_18 = arith.constant 0 : index
      %20 = vector.load %arg8[%c0_17, %c0_18] : memref<2x128xf32, #tpu.memory_space<vmem>>, vector<2x128xf32>
      tpu.vector_store %arg8[%c0_17, %c0_18], %19 {strides = array<i32>} : memref<2x128xf32, #tpu.memory_space<vmem>>, vector<2x128xf32>,
    } else {
    }
    return
  }
  func.func @transform_0(%arg0: i32, %arg1: i32) -> (i32, i32) {
    %c0_i32 = arith.constant 0 : i32
    return %arg0, %arg1 : i32, i32
  }
  func.func @transform_1(%arg0: i32, %arg1: i32) -> (i32, i32) {
    %c0_i32 = arith.constant 0 : i32
    %c0_i32_0 = arith.constant 0 : i32
    return %arg0, %c0_i32 : i32, i32
  }
  func.func @transform_2(%arg0: i32, %arg1: i32) -> (i32, i32) {
    %c0_i32 = arith.constant 0 : i32
    %c0_i32_0 = arith.constant 0 : i32
    %c0_i32_1 = arith.constant 0 : i32
    return %c0_i32, %c0_i32_0 : i32, i32
  }
  func.func @transform_3(%arg0: i32, %arg1: i32) -> (i32, i32) {
    %c0_i32 = arith.constant 0 : i32
    %c0_i32_0 = arith.constant 0 : i32
    %c0_i32_1 = arith.constant 0 : i32
    return %c0_i32, %c0_i32_0 : i32, i32
  }
  func.func @transform_4(%arg0: i32, %arg1: i32) -> (i32, i32) {
    %c0_i32 = arith.constant 0 : i32
    %c0_i32_0 = arith.constant 0 : i32
    %c0_i32_1 = arith.constant 0 : i32
    return %c0_i32, %c0_i32_0 : i32, i32
  }
  func.func @transform_5(%arg0: i32, %arg1: i32) -> (i32, i32) {
    %c0_i32 = arith.constant 0 : i32
    %c0_i32_0 = arith.constant 0 : i32
    %c0_i32_1 = arith.constant 0 : i32
    return %c0_i32, %c0_i32_0 : i32, i32
  }
  func.func @transform_6(%arg0: i32, %arg1: i32) -> (i32, i32) {
    %c0_i32 = arith.constant 0 : i32
    %c0_i32_0 = arith.constant 0 : i32
    return %arg0, %c0_i32 : i32, i32
  }
}

</mosaic_0001>

<llo_original>
// kernel: _lambda_.1
$region0: #{_lambda_.1}
  #allocation0 [shape = 'u32[]', space=smem, size = 0x4, offset = 0x4, fixed_abs, tag = 'smem constant byte address 0x4 - core index']
  #allocation1 [shape = 'u32[144,128]{1,0:T(1,128)}', space=vmem, size = 0x12000, scoped, tag = 'internal scratch']
  #allocation2 [shape = 'f32[2,128]{1,0:T(2,128)}', space=vmem, size = 0x400, scoped, tag = 'scratch operand']
  %s0 = inlined_call_operand.vmem [shape: f32[2,32], index: 0, kind: input, shape index: {}]
  %s1 = inlined_call_operand.vmem [shape: f32[2,3], index: 1, kind: input, shape index: {}]
  %s2 = inlined_call_operand.vmem [shape: f32[32,128], index: 2, kind: input, shape index: {}]
  %s3 = inlined_call_operand.vmem [shape: f32[3,128], index: 3, kind: input, shape index: {}]
  %s4 = inlined_call_operand.vmem [shape: f32[2,128], index: 4, kind: input, shape index: {}]
  %s5 = inlined_call_operand.hbm [shape: f32[128,128], index: 5, kind: input, shape index: {}]
  %s6 = inlined_call_operand.hbm [shape: f32[2,128], index: 6, kind: output, shape index: {}]
  %s7 = sld [smem:[#allocation0]]
  $region46: #{_lambda_.1} parent=0
    _
  %s9 = ssub.s32 1, %s7
  %s10 = scalar_select 0, %s9, %s7
  $region1: #{_lambda_.1} parent=0
    #allocation3 [shape = 'u8[65536]{0}', space=vmem, size = 0x10000, scoped, tag = 'input window, operand 5, single buffered']
    #allocation4 [shape = 's32[1]{0}', space=sflag, size = 0x4, scoped, tag = 'scoped memory for _lambda_.1']
    #allocation5 [shape = 's32[1]{0}', space=sflag, size = 0x4, scoped, tag = 'scoped memory for _lambda_.1']
    #allocation6 [shape = 'u8[1024]{0}', space=vmem, size = 0x400, scoped, tag = 'output window, operand 0, single buffered']
    %11 = vsyncpa [#allocation4], 0
    %12 = vsyncpa [#allocation5], 0
    // Predicated region
    $region2: #{_lambda_.1} parent=1 // pred_check
      _
    $region3: #{_lambda_.1} parent=1 // pred_check_branch
      %14 = sbr.rel (0) target = $region5
    $region4: #{_lambda_.1} parent=1 // pred_region
      _
    $region5: #{_lambda_.1} parent=1 // pred_fallthru
      _
    // Predicated region
    $region6: #{_lambda_.1} parent=1 // pred_check
      _
    $region7: #{_lambda_.1} parent=1 // pred_check_branch
      %16 = sbr.rel (0) target = $region9
    $region8: #{_lambda_.1} parent=1 // pred_region
      _
    $region9: #{_lambda_.1} parent=1 // pred_fallthru
      _
    // Predicated region
    $region10: #{_lambda_.1} parent=1 // pred_check
      _
    $region11: #{_lambda_.1} parent=1 // pred_check_branch
      %18 = sbr.rel (0) target = $region13
    $region12: #{_lambda_.1} parent=1 // pred_region
      _
    $region13: #{_lambda_.1} parent=1 // pred_fallthru
      _
    // Predicated region
    $region14: #{_lambda_.1} parent=1 // pred_check
      _
    $region15: #{_lambda_.1} parent=1 // pred_check_branch
      %20 = sbr.rel (0) target = $region17
    $region16: #{_lambda_.1} parent=1 // pred_region
      _
    $region17: #{_lambda_.1} parent=1 // pred_fallthru
      _
    // Predicated region
    $region18: #{_lambda_.1} parent=1 // pred_check
      _
    $region19: #{_lambda_.1} parent=1 // pred_check_branch
      %22 = sbr.rel (0) target = $region21
    $region20: #{_lambda_.1} parent=1 // pred_region
      _
    $region21: #{_lambda_.1} parent=1 // pred_fallthru
      _
    // Predicated region
    $region22: #{_lambda_.1} parent=1 // pred_check
      _
    $region23: #{_lambda_.1} parent=1 // pred_check_branch
      %24 = sbr.rel (0) target = $region25
    $region24: #{_lambda_.1} parent=1 // pred_region
      %s26 = ssub.s32 2048, 2048
      %27 = vsyncadd [#allocation4], %s26
      %s28 = sshll.u32 [#allocation3], 4
      %s29 = int_to_ptr.vmem [resolvable:$true] %s28
      %34 = dma.hbm_to_vmem [thread:$0]  %s5, 2048, %s29, [#allocation4], 128, 128, 8
    $region25: #{_lambda_.1} parent=1 // pred_fallthru
      _
    // Predicated region
    $region26: #{_lambda_.1} parent=1 // pred_check
      _
    $region27: #{_lambda_.1} parent=1 // pred_check_branch
      %36 = sbr.rel (0) target = $region29
    $region28: #{_lambda_.1} parent=1 // pred_region
      %37 = dma.done [#allocation4], 2048
    $region29: #{_lambda_.1} parent=1 // pred_fallthru
      _
    %p38 = scmp.eq.s32.totalorder 0, 0
    // Predicated region
    $region30: #{_lambda_.1} parent=1 // pred_check
      %p39 = pneg %p38
    $region31: #{_lambda_.1} parent=1 // pred_check_branch
      %41 = sbr.rel (%p39) target = $region33
    $region32: #{_lambda_.1} parent=1 // pred_region
      %v42 = vld [vmem:[%s1] sm:$0x3]
      %v43 = vld [vmem:[%s3] sm:$0x7]
      %v44 = vld [vmem:[%s4] sm:$0x1]
      %v45 = vlaneseq
      %v46 = vshrl.u32 %v45, 7
      %v47 = vsub.s32 0, %v46
      %v48 = vrot.slane %v44, %v47
      %vm49 = vcmask 23552
      %v51 = vsel %vm49, %v42, 0
      %vm53 = vcmask 1042432
      %v55 = vsel %vm53, %v43, 0
      %57 = vmatprep.subr.mxu0 0.0
      %58 = vmatpush1.msra.mxu0 %v55
      %59 = vmatprep.subr.mxu0 0.0
      %60 = vmatpush1.msra.mxu0 0.0
      %61 = vmatprep.subr.mxu0 0.0
      %62 = vmatpush1.msra.mxu0 0.0
      %63 = vmatprep.subr.mxu0 0.0
      %64 = vmatpush1.msra.mxu0 0.0
      %65 = vmatprep.subr.mxu0 0.0
      %66 = vmatpush1.msra.mxu0 0.0
      %67 = vmatprep.subr.mxu0 0.0
      %68 = vmatpush1.msra.mxu0 0.0
      %69 = vmatprep.subr.mxu0 0.0
      %70 = vmatpush1.msra.mxu0 0.0
      %71 = vmatprep.subr.mxu0 0.0
      %72 = vmatpush1.msra.mxu0 0.0
      %73 = vmatprep.subr.mxu0 0.0
      %74 = vmatpush1.msra.mxu0 0.0
      %75 = vmatprep.subr.mxu0 0.0
      %76 = vmatpush1.msra.mxu0 0.0
      %77 = vmatprep.subr.mxu0 0.0
      %78 = vmatpush1.msra.mxu0 0.0
      %79 = vmatprep.subr.mxu0 0.0
      %80 = vmatpush1.msra.mxu0 0.0
      %81 = vmatprep.subr.mxu0 0.0
      %82 = vmatpush1.msra.mxu0 0.0
      %83 = vmatprep.subr.mxu0 0.0
      %84 = vmatpush1.msra.mxu0 0.0
      %85 = vmatprep.subr.mxu0 0.0
      %86 = vmatpush1.msra.mxu0 0.0
      %87 = vmatprep.subr.mxu0 0.0
      %88 = vmatpush1.msra.mxu0 0.0
      %89 = vmatprep.subr.mxu0 0.0
      %90 = vmatpush1.msra.mxu0 0.0
      %91 = vmatprep.subr.mxu0 0.0
      %92 = vmatpush1.msra.mxu0 0.0
      %93 = vmatprep.subr.mxu0 0.0
      %94 = vmatpush1.msra.mxu0 0.0
      %95 = vmatprep.subr.mxu0 0.0
      %96 = vmatpush1.msra.mxu0 0.0
      %97 = vmatprep.subr.mxu0 0.0
      %98 = vmatpush1.msra.mxu0 0.0
      %99 = vmatprep.subr.mxu0 0.0
      %100 = vmatpush1.msra.mxu0 0.0
      %101 = vmatprep.subr.mxu0 0.0
      %102 = vmatpush1.msra.mxu0 0.0
      %103 = vmatprep.subr.mxu0 0.0
      %104 = vmatpush1.msra.mxu0 0.0
      %105 = vmatprep.subr.mxu0 0.0
      %106 = vmatpush1.msra.mxu0 0.0
      %107 = vmatprep.subr.mxu0 0.0
      %108 = vmatpush1.msra.mxu0 0.0
      %109 = vmatprep.subr.mxu0 0.0
      %110 = vmatpush1.msra.mxu0 0.0
      %111 = vmatprep.subr.mxu0 0.0
      %112 = vmatpush1.msra.mxu0 0.0
      %113 = vmatprep.subr.mxu0 0.0
      %114 = vmatpush1.msra.mxu0 0.0
      %115 = vmatprep.subr.mxu0 0.0
      %116 = vmatpush1.msra.mxu0 0.0
      %117 = vmatprep.subr.mxu0 0.0
      %118 = vmatpush1.msra.mxu0 0.0
      %119 = vmatprep.subr.mxu0 0.0
      %120 = vmatpush1.msra.mxu0 0.0
      %121 = vmatprep.mubr.f32.mxu0 0.0
      %122 = vmatmul.mubr.f32.gmra.mrb[0].mxu0 %v51
      %v123 = vpop.f32.mrb[0].mxu0
      %v124 = vadd.f32 %v48, %v123
      %v125 = vpop.f32.mrb[0].mxu0
      %126 = vdwg.mxu0
      %127 = vst [vmem:[#allocation2] sm:$0x3] %v124
    $region33: #{_lambda_.1} parent=1 // pred_fallthru
      _
    %v128 = vld [vmem:[#allocation2] sm:$0x3]
    %v129 = vld [vmem:[%s0] sm:$0x3]
    %v130 = vld [vmem:[%s2] sm:$0xff]
    %v131 = vld [vmem:[%s2 + $0x8] sm:$0xff]
    %v132 = vld [vmem:[%s2 + $0x10] sm:$0xff]
    %v133 = vld [vmem:[%s2 + $0x18] sm:$0xff]
    %vm134 = vcmask 261120
    %v136 = vsel %vm134, %v129, 0
    %138 = vmatprep.subr.mxu0 0.0
    %139 = vmatpush1.msra.mxu0 %v130
    %140 = vmatprep.subr.mxu0 0.0
    %141 = vmatpush1.msra.mxu0 %v131
    %142 = vmatprep.subr.mxu0 0.0
    %143 = vmatpush1.msra.mxu0 %v132
    %144 = vmatprep.subr.mxu0 0.0
    %145 = vmatpush1.msra.mxu0 %v133
    %146 = vmatprep.subr.mxu0 0.0
    %147 = vmatpush1.msra.mxu0 0.0
    %148 = vmatprep.subr.mxu0 0.0
    %149 = vmatpush1.msra.mxu0 0.0
    %150 = vmatprep.subr.mxu0 0.0
    %151 = vmatpush1.msra.mxu0 0.0
    %152 = vmatprep.subr.mxu0 0.0
    %153 = vmatpush1.msra.mxu0 0.0
    %154 = vmatprep.subr.mxu0 0.0
    %155 = vmatpush1.msra.mxu0 0.0
    %156 = vmatprep.subr.mxu0 0.0
    %157 = vmatpush1.msra.mxu0 0.0
    %158 = vmatprep.subr.mxu0 0.0
    %159 = vmatpush1.msra.mxu0 0.0
    %160 = vmatprep.subr.mxu0 0.0
    %161 = vmatpush1.msra.mxu0 0.0
    %162 = vmatprep.subr.mxu0 0.0
    %163 = vmatpush1.msra.mxu0 0.0
    %164 = vmatprep.subr.mxu0 0.0
    %165 = vmatpush1.msra.mxu0 0.0
    %166 = vmatprep.subr.mxu0 0.0
    %167 = vmatpush1.msra.mxu0 0.0
    %168 = vmatprep.subr.mxu0 0.0
    %169 = vmatpush1.msra.mxu0 0.0
    %170 = vmatprep.subr.mxu0 0.0
    %171 = vmatpush1.msra.mxu0 0.0
    %172 = vmatprep.subr.mxu0 0.0
    %173 = vmatpush1.msra.mxu0 0.0
    %174 = vmatprep.subr.mxu0 0.0
    %175 = vmatpush1.msra.mxu0 0.0
    %176 = vmatprep.subr.mxu0 0.0
    %177 = vmatpush1.msra.mxu0 0.0
    %178 = vmatprep.subr.mxu0 0.0
    %179 = vmatpush1.msra.mxu0 0.0
    %180 = vmatprep.subr.mxu0 0.0
    %181 = vmatpush1.msra.mxu0 0.0
    %182 = vmatprep.subr.mxu0 0.0
    %183 = vmatpush1.msra.mxu0 0.0
    %184 = vmatprep.subr.mxu0 0.0
    %185 = vmatpush1.msra.mxu0 0.0
    %186 = vmatprep.subr.mxu0 0.0
    %187 = vmatpush1.msra.mxu0 0.0
    %188 = vmatprep.subr.mxu0 0.0
    %189 = vmatpush1.msra.mxu0 0.0
    %190 = vmatprep.subr.mxu0 0.0
    %191 = vmatpush1.msra.mxu0 0.0
    %192 = vmatprep.subr.mxu0 0.0
    %193 = vmatpush1.msra.mxu0 0.0
    %194 = vmatprep.subr.mxu0 0.0
    %195 = vmatpush1.msra.mxu0 0.0
    %196 = vmatprep.subr.mxu0 0.0
    %197 = vmatpush1.msra.mxu0 0.0
    %198 = vmatprep.subr.mxu0 0.0
    %199 = vmatpush1.msra.mxu0 0.0
    %200 = vmatprep.subr.mxu0 0.0
    %201 = vmatpush1.msra.mxu0 0.0
    %202 = vmatprep.mubr.f32.mxu0 0.0
    %203 = vmatmul.mubr.f32.gmra.mrb[0].mxu0 %v136
    %v204 = vpop.f32.mrb[0].mxu0
    %v205 = vadd.f32 0.0, %v204
    %v206 = vpop.f32.mrb[0].mxu0
    %207 = vdwg.mxu0
    %v208 = vadd.f32 %v128, %v205
    %209 = vst [vmem:[#allocation2] sm:$0x3] %v208
    // Predicated region
    $region34: #{_lambda_.1} parent=1 // pred_check
      %p210 = pneg %p38
    $region35: #{_lambda_.1} parent=1 // pred_check_branch
      %212 = sbr.rel (%p210) target = $region37
    $region36: #{_lambda_.1} parent=1 // pred_region
      %v213 = vld [vmem:[#allocation2] sm:$0x3]
      %v214 = vmax.f32 %v213, 0.0
      %v215 = vld [vmem:[#allocation3] sm:$0xff]
      %v216 = vld [vmem:[#allocation3 + $0x8] sm:$0xff]
      %v217 = vld [vmem:[#allocation3 + $0x10] sm:$0xff]
      %v218 = vld [vmem:[#allocation3 + $0x18] sm:$0xff]
      %v219 = vld [vmem:[#allocation3 + $0x20] sm:$0xff]
      %v220 = vld [vmem:[#allocation3 + $0x28] sm:$0xff]
      %v221 = vld [vmem:[#allocation3 + $0x30] sm:$0xff]
      %v222 = vld [vmem:[#allocation3 + $0x38] sm:$0xff]
      %v223 = vld [vmem:[#allocation3 + $0x40] sm:$0xff]
      %v224 = vld [vmem:[#allocation3 + $0x48] sm:$0xff]
      %v225 = vld [vmem:[#allocation3 + $0x50] sm:$0xff]
      %v226 = vld [vmem:[#allocation3 + $0x58] sm:$0xff]
      %v227 = vld [vmem:[#allocation3 + $0x60] sm:$0xff]
      %v228 = vld [vmem:[#allocation3 + $0x68] sm:$0xff]
      %v229 = vld [vmem:[#allocation3 + $0x70] sm:$0xff]
      %v230 = vld [vmem:[#allocation3 + $0x78] sm:$0xff]
      %v231 = vld [vmem:[%s4 + $0x1] sm:$0x1]
      %v232 = vlaneseq
      %v233 = vshrl.u32 %v232, 7
      %v234 = vsub.s32 0, %v233
      %v235 = vrot.slane %v231, %v234
      %236 = vmatprep.subr.mxu0 0.0
      %237 = vmatpush1.msra.mxu0 %v215
      %238 = vmatprep.subr.mxu0 0.0
      %239 = vmatpush1.msra.mxu0 %v216
      %240 = vmatprep.subr.mxu0 0.0
      %241 = vmatpush1.msra.mxu0 %v217
      %242 = vmatprep.subr.mxu0 0.0
      %243 = vmatpush1.msra.mxu0 %v218
      %244 = vmatprep.subr.mxu0 0.0
      %245 = vmatpush1.msra.mxu0 %v219
      %246 = vmatprep.subr.mxu0 0.0
      %247 = vmatpush1.msra.mxu0 %v220
      %248 = vmatprep.subr.mxu0 0.0
      %249 = vmatpush1.msra.mxu0 %v221
      %250 = vmatprep.subr.mxu0 0.0
      %251 = vmatpush1.msra.mxu0 %v222
      %252 = vmatprep.subr.mxu0 0.0
      %253 = vmatpush1.msra.mxu0 %v223
      %254 = vmatprep.subr.mxu0 0.0
      %255 = vmatpush1.msra.mxu0 %v224
      %256 = vmatprep.subr.mxu0 0.0
      %257 = vmatpush1.msra.mxu0 %v225
      %258 = vmatprep.subr.mxu0 0.0
      %259 = vmatpush1.msra.mxu0 %v226
      %260 = vmatprep.subr.mxu0 0.0
      %261 = vmatpush1.msra.mxu0 %v227
      %262 = vmatprep.subr.mxu0 0.0
      %263 = vmatpush1.msra.mxu0 %v228
      %264 = vmatprep.subr.mxu0 0.0
      %265 = vmatpush1.msra.mxu0 %v229
      %266 = vmatprep.subr.mxu0 0.0
      %267 = vmatpush1.msra.mxu0 %v230
      %268 = vmatprep.subr.mxu0 0.0
      %269 = vmatpush1.msra.mxu0 0.0
      %270 = vmatprep.subr.mxu0 0.0
      %271 = vmatpush1.msra.mxu0 0.0
      %272 = vmatprep.subr.mxu0 0.0
      %273 = vmatpush1.msra.mxu0 0.0
      %274 = vmatprep.subr.mxu0 0.0
      %275 = vmatpush1.msra.mxu0 0.0
      %276 = vmatprep.subr.mxu0 0.0
      %277 = vmatpush1.msra.mxu0 0.0
      %278 = vmatprep.subr.mxu0 0.0
      %279 = vmatpush1.msra.mxu0 0.0
      %280 = vmatprep.subr.mxu0 0.0
      %281 = vmatpush1.msra.mxu0 0.0
      %282 = vmatprep.subr.mxu0 0.0
      %283 = vmatpush1.msra.mxu0 0.0
      %284 = vmatprep.subr.mxu0 0.0
      %285 = vmatpush1.msra.mxu0 0.0
      %286 = vmatprep.subr.mxu0 0.0
      %287 = vmatpush1.msra.mxu0 0.0
      %288 = vmatprep.subr.mxu0 0.0
      %289 = vmatpush1.msra.mxu0 0.0
      %290 = vmatprep.subr.mxu0 0.0
      %291 = vmatpush1.msra.mxu0 0.0
      %292 = vmatprep.subr.mxu0 0.0
      %293 = vmatpush1.msra.mxu0 0.0
      %294 = vmatprep.subr.mxu0 0.0
      %295 = vmatpush1.msra.mxu0 0.0
      %296 = vmatprep.subr.mxu0 0.0
      %297 = vmatpush1.msra.mxu0 0.0
      %298 = vmatprep.subr.mxu0 0.0
      %299 = vmatpush1.msra.mxu0 0.0
      %300 = vmatprep.mubr.f32.mxu0 0.0
      %301 = vmatmul.mubr.f32.gmra.mrb[0].mxu0 %v214
      %v302 = vpop.f32.mrb[0].mxu0
      %v303 = vadd.f32 %v235, %v302
      %v304 = vpop.f32.mrb[0].mxu0
      %305 = vdwg.mxu0
      %306 = vst [vmem:[#allocation6] sm:$0x3] %v303
    $region37: #{_lambda_.1} parent=1 // pred_fallthru
      _
    // Predicated region
    $region38: #{_lambda_.1} parent=1 // pred_check
      _
    $region39: #{_lambda_.1} parent=1 // pred_check_branch
      %308 = sbr.rel (0) target = $region41
    $region40: #{_lambda_.1} parent=1 // pred_region
      %s310 = ssub.s32 32, 32
      %311 = vsyncadd [#allocation5], %s310
      %s313 = sshll.u32 [#allocation6], 4
      %s314 = int_to_ptr.vmem [resolvable:$true] %s313
      %316 = dma.vmem_to_hbm [thread:$0]  %s314, 32, %s6, [#allocation5]
    $region41: #{_lambda_.1} parent=1 // pred_fallthru
      _
    // Predicated region
    $region42: #{_lambda_.1} parent=1 // pred_check
      _
    $region43: #{_lambda_.1} parent=1 // pred_check_branch
      %318 = sbr.rel (0) target = $region45
    $region44: #{_lambda_.1} parent=1 // pred_region
      %319 = dma.done [#allocation5], 32
    $region45: #{_lambda_.1} parent=1 // pred_fallthru
      _
    %320 = vsyncpa [#allocation4], 1
    %321 = vsyncpa [#allocation5], 1

</llo_original>
